<compile_context>
chip_gen: v6e
topology: v6e:2x2x1
jax: 0.10.0
libtpu: 0.0.40
codegen_flags: <defaults>
</compile_context>

<pallas_src>
import functools

import jax
import jax.numpy as jnp
from jax import lax
from jax.experimental import pallas as pl
from jax.experimental.pallas import tpu as pltpu

_NEG_INF = -1e30  # f32 additive-mask constant; mask math is always kept in f32


def gat_fused_kernel(h_ref, mask_ref, wqkv_ref, bqkv_ref, wl_ref, bl_ref, out_ref, *,
                     num_heads, out_dim):
    """All heads + all projections in ONE grid step (tiny graph -> everything in VMEM)."""
    hd_total = num_heads * out_dim
    mm_dtype = wqkv_ref.dtype        # matmul operand dtype (f32 or bf16)

    x = h_ref[...]                   # (N, in_dim)
    mask = mask_ref[...]             # (N, N) f32 additive mask: 0 on edges, -1e30 off-graph

    # Fused Q/K/V projection for all heads: (N, in_dim) @ (in_dim, 3*H*out_dim), f32 accum.
    qkv = jnp.dot(x, wqkv_ref[...], preferred_element_type=jnp.float32) + bqkv_ref[...]
    q_all = qkv[:, 0:hd_total]
    k_all = qkv[:, hd_total:2 * hd_total]
    v_all = qkv[:, 2 * hd_total:3 * hd_total]

    head_outs = []
    for hd in range(num_heads):      # static unroll (num_heads is small)
        lo, hi = hd * out_dim, (hd + 1) * out_dim
        q = q_all[:, lo:hi].astype(mm_dtype)
        k = k_all[:, lo:hi].astype(mm_dtype)
        v = v_all[:, lo:hi].astype(mm_dtype)

        # scores[i, j] = q_i . k_j  -- trans-B MXU contraction, no k.T materialization.
        scores = lax.dot_general(q, k, dimension_numbers=(((1,), (1,)), ((), ())),
                                 preferred_element_type=jnp.float32)     # (N, N) f32

        masked = scores + mask                       # additive mask (binary adjacency)
        m = jnp.max(masked, axis=-1, keepdims=True)
        e = jnp.exp(masked - m)                      # exact 0 off-graph (-1e30 underflows)
        denom = jnp.maximum(jnp.sum(e, axis=-1, keepdims=True), 1e-30)   # isolated-node guard

        # Aggregate unnormalized, then scale the small (N, out_dim) result with the EUP
        # approximate reciprocal of the softmax denominator (VPU mul; no (N, N) divide).
        agg = jnp.dot(e.astype(mm_dtype), v, preferred_element_type=jnp.float32)
        head_outs.append(agg * pl.reciprocal(denom, approx=True))

    attn = jnp.concatenate(head_outs, axis=1)        # (N, H*out_dim) f32, concat layout

    # GATLayer.apply for all heads at once: block-diagonal linear + relu, lane-dense store.
    out = jnp.dot(attn.astype(mm_dtype), wl_ref[...],
                  preferred_element_type=jnp.float32) + bl_ref[...]
    out_ref[...] = jnp.maximum(out, 0.0).astype(out_ref.dtype)


def multi_head_gat(h, adj, params, merge="cat", matmul_dtype=jnp.float32):
    """params = (wq, bq, wk, bk, wv, bv, wl, bl);
       wq/wk/wv: (H, in_dim, out_dim); wl: (H, out_dim, out_dim); biases: (H, 1, out_dim).
       adj must be binary with at least one in-neighbor per node (e.g. self-loops)."""
    wq, bq, wk, bk, wv, bv, wl, bl = params
    H, in_dim, out_dim = wq.shape
    N = h.shape[0]
    hd_total = H * out_dim

    # ---- parameter packing (cheap XLA ops, fused/constant-folded under jit) ----
    def heads_to_lanes(w):           # (H, a, b) -> (a, H*b), head-major column blocks
        return jnp.transpose(w, (1, 0, 2)).reshape(w.shape[1], H * w.shape[2])

    w_qkv = jnp.concatenate(
        [heads_to_lanes(wq), heads_to_lanes(wk), heads_to_lanes(wv)], axis=1)  # (in, 3*H*out)
    b_qkv = jnp.concatenate(
        [bq.reshape(1, hd_total), bk.reshape(1, hd_total), bv.reshape(1, hd_total)],
        axis=1)                                                                # (1, 3*H*out)

    # Block-diagonal (H*out, H*out) matrix for the per-head output linear.
    eye_h = jnp.eye(H, dtype=wl.dtype)
    wl_bd = jnp.einsum("hg,hab->hagb", eye_h, wl).reshape(hd_total, hd_total)
    b_l = bl.reshape(1, hd_total)

    # Additive softmax mask (always f32, even when matmul operands are bf16).
    mask = jnp.where(adj > 0, 0.0, _NEG_INF).astype(jnp.float32)

    mm = matmul_dtype
    kernel = functools.partial(gat_fused_kernel, num_heads=H, out_dim=out_dim)
    vmem = lambda: pl.BlockSpec(memory_space=pltpu.MemorySpace.VMEM)

    # TODO(synk): for large N, add a "parallel" node-tile grid axis (v7x megacore) and a
    # key-blocked flash-style softmax instead of the dense (N, N) scores tile.
    out = pl.pallas_call(
        kernel,
        out_shape=jax.ShapeDtypeStruct((N, hd_total), jnp.float32),
        in_specs=[vmem() for _ in range(6)],
        out_specs=vmem(),
    )(h.astype(mm), mask, w_qkv.astype(mm), b_qkv.astype(jnp.float32),
      wl_bd.astype(mm), b_l.astype(jnp.float32))

    if merge == "cat":
        return out                       # already (N, H*out_dim), no transpose/reshape needed
    # merge != 'cat' in the reference: torch.mean(torch.stack(head_outs)) -> scalar
    return jnp.mean(out)


def reference_multi_head_gat(h, adj, params, merge="cat"):
    """Pure-JAX reference mirroring the PyTorch/DGL semantics (f32 everywhere)."""
    wq, bq, wk, bk, wv, bv, wl, bl = params
    H = wq.shape[0]
    outs = []
    for hd in range(H):
        q = h @ wq[hd] + bq[hd, 0]
        k = h @ wk[hd] + bk[hd, 0]
        v = h @ wv[hd] + bv[hd, 0]
        scores = q @ k.T
        masked = jnp.where(adj > 0, scores, _NEG_INF)
        s = jax.nn.softmax(masked, axis=-1)
        av = s @ v
        outs.append(jax.nn.relu(av @ wl[hd] + bl[hd, 0]))
    if merge == "cat":
        return jnp.concatenate(outs, axis=1)
    return jnp.mean(jnp.stack(outs))


def make_params(key, num_heads, in_dim, out_dim):
    ks = jax.random.split(key, 8)
    scale = 0.1
    wq = scale * jax.random.normal(ks[0], (num_heads, in_dim, out_dim), jnp.float32)
    bq = scale * jax.random.normal(ks[1], (num_heads, 1, out_dim), jnp.float32)
    wk = scale * jax.random.normal(ks[2], (num_heads, in_dim, out_dim), jnp.float32)
    bk = scale * jax.random.normal(ks[3], (num_heads, 1, out_dim), jnp.float32)
    wv = scale * jax.random.normal(ks[4], (num_heads, in_dim, out_dim), jnp.float32)
    bv = scale * jax.random.normal(ks[5], (num_heads, 1, out_dim), jnp.float32)
    wl = scale * jax.random.normal(ks[6], (num_heads, out_dim, out_dim), jnp.float32)
    bl = scale * jax.random.normal(ks[7], (num_heads, 1, out_dim), jnp.float32)
    return (wq, bq, wk, bk, wv, bv, wl, bl)


if __name__ == "__main__":
    N, in_dim, out_dim, num_heads = 16, 32, 16, 4

    root = jax.random.PRNGKey(0)
    k_h, k_adj, k_par = jax.random.split(root, 3)

    h = jax.random.normal(k_h, (N, in_dim), jnp.float32)

    # Random directed graph + self-loops (every node has >= 1 in-neighbor, matching the
    # DGL mailbox reduce which only runs on nodes that receive messages).
    adj = (jax.random.uniform(k_adj, (N, N)) < 0.3).astype(jnp.float32)
    adj = jnp.maximum(adj, jnp.eye(N, dtype=jnp.float32))

    params = make_params(k_par, num_heads, in_dim, out_dim)
    ref = reference_multi_head_gat(h, adj, params, merge="cat")

    # f32 MXU operands (exact path; tolerance covers the EUP approx-reciprocal).
    f32_fn = jax.jit(functools.partial(multi_head_gat, merge="cat",
                                       matmul_dtype=jnp.float32))
    out_f32 = jax.block_until_ready(f32_fn(h, adj, params))
    assert out_f32.shape == (N, num_heads * out_dim), out_f32.shape
    assert jnp.allclose(out_f32, ref, rtol=1e-2, atol=1e-2), \
        float(jnp.max(jnp.abs(out_f32 - ref)))

    # bf16 MXU operands (v5e/v6e/v7x bf16-native MXU); softmax stays f32 inside the kernel.
    bf16_fn = jax.jit(functools.partial(multi_head_gat, merge="cat",
                                        matmul_dtype=jnp.bfloat16))
    out_bf16 = jax.block_until_ready(bf16_fn(h, adj, params))
    assert out_bf16.shape == (N, num_heads * out_dim), out_bf16.shape
    assert jnp.allclose(out_bf16, ref, rtol=1e-1, atol=1e-1), \
        float(jnp.max(jnp.abs(out_bf16 - ref)))

    print("KERNEL_OK")
</pallas_src>

<mosaic_0001>
module attributes {stable_mosaic.version = 11 : i64} {
  func.func @gat_fused_kernel(%arg0: memref<16x32xf32, #tpu.memory_space<vmem>>, %arg1: memref<16x16xf32, #tpu.memory_space<vmem>>, %arg2: memref<32x192xf32, #tpu.memory_space<vmem>>, %arg3: memref<1x192xf32, #tpu.memory_space<vmem>>, %arg4: memref<64x64xf32, #tpu.memory_space<vmem>>, %arg5: memref<1x64xf32, #tpu.memory_space<vmem>>, %arg6: memref<16x64xf32, #tpu.memory_space<vmem>>) attributes {dimension_semantics = [], scalar_prefetch = 0 : i64, scratch_operands = 0 : i64, tpu.core_type = #tpu.core_type<tc>} {
    %c0 = arith.constant 0 : index
    %c0_0 = arith.constant 0 : index
    %0 = vector.load %arg0[%c0, %c0_0] : memref<16x32xf32, #tpu.memory_space<vmem>>, vector<16x32xf32>
    %c0_1 = arith.constant 0 : index
    %c0_2 = arith.constant 0 : index
    %1 = vector.load %arg1[%c0_1, %c0_2] : memref<16x16xf32, #tpu.memory_space<vmem>>, vector<16x16xf32>
    %c0_3 = arith.constant 0 : index
    %c0_4 = arith.constant 0 : index
    %2 = vector.load %arg2[%c0_3, %c0_4] : memref<32x192xf32, #tpu.memory_space<vmem>>, vector<32x192xf32>
    %cst = arith.constant dense<0.000000e+00> : vector<16x192xf32>
    %3 = tpu.matmul %0, %2, %cst {dimension_numbers = #tpu.dot_dimension_numbers<[1], [0], [0], [1], [0, 0, 1, 1], [], []>} : vector<16x32xf32>, vector<32x192xf32>, vector<16x192xf32> -> vector<16x192xf32>
    %c0_5 = arith.constant 0 : index
    %c0_6 = arith.constant 0 : index
    %4 = vector.load %arg3[%c0_5, %c0_6] : memref<1x192xf32, #tpu.memory_space<vmem>>, vector<1x192xf32>
    %5 = vector.broadcast %4 : vector<1x192xf32> to vector<16x192xf32>
    %6 = arith.addf %3, %5 : vector<16x192xf32>
    %7 = vector.extract_strided_slice %6 {offsets = [0, 0], sizes = [16, 64], strides = [1, 1]} : vector<16x192xf32> to vector<16x64xf32>
    %8 = vector.extract_strided_slice %6 {offsets = [0, 64], sizes = [16, 64], strides = [1, 1]} : vector<16x192xf32> to vector<16x64xf32>
    %9 = vector.extract_strided_slice %6 {offsets = [0, 128], sizes = [16, 64], strides = [1, 1]} : vector<16x192xf32> to vector<16x64xf32>
    %10 = vector.extract_strided_slice %7 {offsets = [0, 0], sizes = [16, 16], strides = [1, 1]} : vector<16x64xf32> to vector<16x16xf32>
    %11 = vector.extract_strided_slice %8 {offsets = [0, 0], sizes = [16, 16], strides = [1, 1]} : vector<16x64xf32> to vector<16x16xf32>
    %12 = vector.extract_strided_slice %9 {offsets = [0, 0], sizes = [16, 16], strides = [1, 1]} : vector<16x64xf32> to vector<16x16xf32>
    %cst_7 = arith.constant dense<0.000000e+00> : vector<16x16xf32>
    %13 = tpu.matmul %10, %11, %cst_7 {dimension_numbers = #tpu.dot_dimension_numbers<[1], [1], [0], [0], [0, 0, 1, 0], [], []>} : vector<16x16xf32>, vector<16x16xf32>, vector<16x16xf32> -> vector<16x16xf32>
    %14 = arith.addf %13, %1 : vector<16x16xf32>
    %cst_8 = arith.constant dense<0xFF800000> : vector<16xf32>
    %15 = vector.multi_reduction <maximumf>, %14, %cst_8 [1] : vector<16x16xf32> to vector<16xf32>
    %16 = vector.shape_cast %15 : vector<16xf32> to vector<16x1xf32>
    %17 = vector.broadcast %16 : vector<16x1xf32> to vector<16x16xf32>
    %18 = arith.subf %14, %17 : vector<16x16xf32>
    %19 = math.exp %18 : vector<16x16xf32>
    %cst_9 = arith.constant dense<0.000000e+00> : vector<16xf32>
    %20 = vector.multi_reduction <add>, %19, %cst_9 [1] : vector<16x16xf32> to vector<16xf32>
    %21 = vector.shape_cast %20 : vector<16xf32> to vector<16x1xf32>
    %cst_10 = arith.constant 1.000000e-30 : f32
    %22 = vector.broadcast %cst_10 : f32 to vector<16x1xf32>
    %23 = arith.maximumf %21, %22 : vector<16x1xf32>
    %cst_11 = arith.constant dense<0.000000e+00> : vector<16x16xf32>
    %24 = tpu.matmul %19, %12, %cst_11 {dimension_numbers = #tpu.dot_dimension_numbers<[1], [0], [0], [1], [0, 0, 1, 1], [], []>} : vector<16x16xf32>, vector<16x16xf32>, vector<16x16xf32> -> vector<16x16xf32>
    %25 = tpu.reciprocal %23 {approx = true} : vector<16x1xf32> -> vector<16x1xf32>
    %26 = vector.broadcast %25 : vector<16x1xf32> to vector<16x16xf32>
    %27 = arith.mulf %24, %26 : vector<16x16xf32>
    %28 = vector.extract_strided_slice %7 {offsets = [0, 16], sizes = [16, 16], strides = [1, 1]} : vector<16x64xf32> to vector<16x16xf32>
    %29 = vector.extract_strided_slice %8 {offsets = [0, 16], sizes = [16, 16], strides = [1, 1]} : vector<16x64xf32> to vector<16x16xf32>
    %30 = vector.extract_strided_slice %9 {offsets = [0, 16], sizes = [16, 16], strides = [1, 1]} : vector<16x64xf32> to vector<16x16xf32>
    %cst_12 = arith.constant dense<0.000000e+00> : vector<16x16xf32>
    %31 = tpu.matmul %28, %29, %cst_12 {dimension_numbers = #tpu.dot_dimension_numbers<[1], [1], [0], [0], [0, 0, 1, 0], [], []>} : vector<16x16xf32>, vector<16x16xf32>, vector<16x16xf32> -> vector<16x16xf32>
    %32 = arith.addf %31, %1 : vector<16x16xf32>
    %cst_13 = arith.constant dense<0xFF800000> : vector<16xf32>
    %33 = vector.multi_reduction <maximumf>, %32, %cst_13 [1] : vector<16x16xf32> to vector<16xf32>
    %34 = vector.shape_cast %33 : vector<16xf32> to vector<16x1xf32>
    %35 = vector.broadcast %34 : vector<16x1xf32> to vector<16x16xf32>
    %36 = arith.subf %32, %35 : vector<16x16xf32>
    %37 = math.exp %36 : vector<16x16xf32>
    %cst_14 = arith.constant dense<0.000000e+00> : vector<16xf32>
    %38 = vector.multi_reduction <add>, %37, %cst_14 [1] : vector<16x16xf32> to vector<16xf32>
    %39 = vector.shape_cast %38 : vector<16xf32> to vector<16x1xf32>
    %cst_15 = arith.constant 1.000000e-30 : f32
    %40 = vector.broadcast %cst_15 : f32 to vector<16x1xf32>
    %41 = arith.maximumf %39, %40 : vector<16x1xf32>
    %cst_16 = arith.constant dense<0.000000e+00> : vector<16x16xf32>
    %42 = tpu.matmul %37, %30, %cst_16 {dimension_numbers = #tpu.dot_dimension_numbers<[1], [0], [0], [1], [0, 0, 1, 1], [], []>} : vector<16x16xf32>, vector<16x16xf32>, vector<16x16xf32> -> vector<16x16xf32>
    %43 = tpu.reciprocal %41 {approx = true} : vector<16x1xf32> -> vector<16x1xf32>
    %44 = vector.broadcast %43 : vector<16x1xf32> to vector<16x16xf32>
    %45 = arith.mulf %42, %44 : vector<16x16xf32>
    %46 = vector.extract_strided_slice %7 {offsets = [0, 32], sizes = [16, 16], strides = [1, 1]} : vector<16x64xf32> to vector<16x16xf32>
    %47 = vector.extract_strided_slice %8 {offsets = [0, 32], sizes = [16, 16], strides = [1, 1]} : vector<16x64xf32> to vector<16x16xf32>
    %48 = vector.extract_strided_slice %9 {offsets = [0, 32], sizes = [16, 16], strides = [1, 1]} : vector<16x64xf32> to vector<16x16xf32>
    %cst_17 = arith.constant dense<0.000000e+00> : vector<16x16xf32>
    %49 = tpu.matmul %46, %47, %cst_17 {dimension_numbers = #tpu.dot_dimension_numbers<[1], [1], [0], [0], [0, 0, 1, 0], [], []>} : vector<16x16xf32>, vector<16x16xf32>, vector<16x16xf32> -> vector<16x16xf32>
    %50 = arith.addf %49, %1 : vector<16x16xf32>
    %cst_18 = arith.constant dense<0xFF800000> : vector<16xf32>
    %51 = vector.multi_reduction <maximumf>, %50, %cst_18 [1] : vector<16x16xf32> to vector<16xf32>
    %52 = vector.shape_cast %51 : vector<16xf32> to vector<16x1xf32>
    %53 = vector.broadcast %52 : vector<16x1xf32> to vector<16x16xf32>
    %54 = arith.subf %50, %53 : vector<16x16xf32>
    %55 = math.exp %54 : vector<16x16xf32>
    %cst_19 = arith.constant dense<0.000000e+00> : vector<16xf32>
    %56 = vector.multi_reduction <add>, %55, %cst_19 [1] : vector<16x16xf32> to vector<16xf32>
    %57 = vector.shape_cast %56 : vector<16xf32> to vector<16x1xf32>
    %cst_20 = arith.constant 1.000000e-30 : f32
    %58 = vector.broadcast %cst_20 : f32 to vector<16x1xf32>
    %59 = arith.maximumf %57, %58 : vector<16x1xf32>
    %cst_21 = arith.constant dense<0.000000e+00> : vector<16x16xf32>
    %60 = tpu.matmul %55, %48, %cst_21 {dimension_numbers = #tpu.dot_dimension_numbers<[1], [0], [0], [1], [0, 0, 1, 1], [], []>} : vector<16x16xf32>, vector<16x16xf32>, vector<16x16xf32> -> vector<16x16xf32>
    %61 = tpu.reciprocal %59 {approx = true} : vector<16x1xf32> -> vector<16x1xf32>
    %62 = vector.broadcast %61 : vector<16x1xf32> to vector<16x16xf32>
    %63 = arith.mulf %60, %62 : vector<16x16xf32>
    %64 = vector.extract_strided_slice %7 {offsets = [0, 48], sizes = [16, 16], strides = [1, 1]} : vector<16x64xf32> to vector<16x16xf32>
    %65 = vector.extract_strided_slice %8 {offsets = [0, 48], sizes = [16, 16], strides = [1, 1]} : vector<16x64xf32> to vector<16x16xf32>
    %66 = vector.extract_strided_slice %9 {offsets = [0, 48], sizes = [16, 16], strides = [1, 1]} : vector<16x64xf32> to vector<16x16xf32>
    %cst_22 = arith.constant dense<0.000000e+00> : vector<16x16xf32>
    %67 = tpu.matmul %64, %65, %cst_22 {dimension_numbers = #tpu.dot_dimension_numbers<[1], [1], [0], [0], [0, 0, 1, 0], [], []>} : vector<16x16xf32>, vector<16x16xf32>, vector<16x16xf32> -> vector<16x16xf32>
    %68 = arith.addf %67, %1 : vector<16x16xf32>
    %cst_23 = arith.constant dense<0xFF800000> : vector<16xf32>
    %69 = vector.multi_reduction <maximumf>, %68, %cst_23 [1] : vector<16x16xf32> to vector<16xf32>
    %70 = vector.shape_cast %69 : vector<16xf32> to vector<16x1xf32>
    %71 = vector.broadcast %70 : vector<16x1xf32> to vector<16x16xf32>
    %72 = arith.subf %68, %71 : vector<16x16xf32>
    %73 = math.exp %72 : vector<16x16xf32>
    %cst_24 = arith.constant dense<0.000000e+00> : vector<16xf32>
    %74 = vector.multi_reduction <add>, %73, %cst_24 [1] : vector<16x16xf32> to vector<16xf32>
    %75 = vector.shape_cast %74 : vector<16xf32> to vector<16x1xf32>
    %cst_25 = arith.constant 1.000000e-30 : f32
    %76 = vector.broadcast %cst_25 : f32 to vector<16x1xf32>
    %77 = arith.maximumf %75, %76 : vector<16x1xf32>
    %cst_26 = arith.constant dense<0.000000e+00> : vector<16x16xf32>
    %78 = tpu.matmul %73, %66, %cst_26 {dimension_numbers = #tpu.dot_dimension_numbers<[1], [0], [0], [1], [0, 0, 1, 1], [], []>} : vector<16x16xf32>, vector<16x16xf32>, vector<16x16xf32> -> vector<16x16xf32>
    %79 = tpu.reciprocal %77 {approx = true} : vector<16x1xf32> -> vector<16x1xf32>
    %80 = vector.broadcast %79 : vector<16x1xf32> to vector<16x16xf32>
    %81 = arith.mulf %78, %80 : vector<16x16xf32>
    %82 = tpu.concatenate %27, %45, %63, %81 in 1 : vector<16x16xf32>, vector<16x16xf32>, vector<16x16xf32>, vector<16x16xf32> -> vector<16x64xf32>
    %c0_27 = arith.constant 0 : index
    %c0_28 = arith.constant 0 : index
    %83 = vector.load %arg4[%c0_27, %c0_28] : memref<64x64xf32, #tpu.memory_space<vmem>>, vector<64x64xf32>
    %cst_29 = arith.constant dense<0.000000e+00> : vector<16x64xf32>
    %84 = tpu.matmul %82, %83, %cst_29 {dimension_numbers = #tpu.dot_dimension_numbers<[1], [0], [0], [1], [0, 0, 1, 1], [], []>} : vector<16x64xf32>, vector<64x64xf32>, vector<16x64xf32> -> vector<16x64xf32>
    %c0_30 = arith.constant 0 : index
    %c0_31 = arith.constant 0 : index
    %85 = vector.load %arg5[%c0_30, %c0_31] : memref<1x64xf32, #tpu.memory_space<vmem>>, vector<1x64xf32>
    %86 = vector.broadcast %85 : vector<1x64xf32> to vector<16x64xf32>
    %87 = arith.addf %84, %86 : vector<16x64xf32>
    %cst_32 = arith.constant 0.000000e+00 : f32
    %88 = vector.broadcast %cst_32 : f32 to vector<16x64xf32>
    %89 = arith.maximumf %87, %88 : vector<16x64xf32>
    %c0_33 = arith.constant 0 : index
    %c0_34 = arith.constant 0 : index
    %90 = vector.load %arg6[%c0_33, %c0_34] : memref<16x64xf32, #tpu.memory_space<vmem>>, vector<16x64xf32>
    tpu.vector_store %arg6[%c0_33, %c0_34], %89 {strides = array<i32>} : memref<16x64xf32, #tpu.memory_space<vmem>>, vector<16x64xf32>,
    return
  }
}

</mosaic_0001>

<llo_original>
// kernel: multi_head_gat.1
$region0: #{multi_head_gat.1}
  #allocation0 [shape = 'u32[]', space=smem, size = 0x4, offset = 0x4, fixed_abs, tag = 'smem constant byte address 0x4 - core index']
  #allocation1 [shape = 'u32[144,128]{1,0:T(1,128)}', space=vmem, size = 0x12000, scoped, tag = 'internal scratch']
  %s0 = inlined_call_operand.vmem [shape: f32[16,32], index: 0, kind: input, shape index: {}]
  %s1 = inlined_call_operand.vmem [shape: f32[16,16], index: 1, kind: input, shape index: {}]
  %s2 = inlined_call_operand.vmem [shape: f32[32,192], index: 2, kind: input, shape index: {}]
  %s3 = inlined_call_operand.vmem [shape: f32[1,192], index: 3, kind: input, shape index: {}]
  %s4 = inlined_call_operand.vmem [shape: f32[64,64], index: 4, kind: input, shape index: {}]
  %s5 = inlined_call_operand.vmem [shape: f32[1,64], index: 5, kind: input, shape index: {}]
  %s6 = inlined_call_operand.hbm [shape: f32[16,64], index: 6, kind: output, shape index: {}]
  %s7 = sld [smem:[#allocation0]]
  $region34: #{multi_head_gat.1} parent=0
    _
  %s9 = ssub.s32 1, %s7
  %s10 = scalar_select 0, %s9, %s7
  $region1: #{multi_head_gat.1} parent=0
    #allocation2 [shape = 'u8[8192]{0}', space=vmem, size = 0x2000, scoped, tag = 'output window, operand 0, single buffered']
    #allocation3 [shape = 's32[1]{0}', space=sflag, size = 0x4, scoped, tag = 'scoped memory for multi_head_gat.1']
    %11 = vsyncpa [#allocation3], 0
    // Predicated region
    $region2: #{multi_head_gat.1} parent=1 // pred_check
      _
    $region3: #{multi_head_gat.1} parent=1 // pred_check_branch
      %13 = sbr.rel (0) target = $region5
    $region4: #{multi_head_gat.1} parent=1 // pred_region
      _
    $region5: #{multi_head_gat.1} parent=1 // pred_fallthru
      _
    // Predicated region
    $region6: #{multi_head_gat.1} parent=1 // pred_check
      _
    $region7: #{multi_head_gat.1} parent=1 // pred_check_branch
      %15 = sbr.rel (0) target = $region9
    $region8: #{multi_head_gat.1} parent=1 // pred_region
      _
    $region9: #{multi_head_gat.1} parent=1 // pred_fallthru
      _
    // Predicated region
    $region10: #{multi_head_gat.1} parent=1 // pred_check
      _
    $region11: #{multi_head_gat.1} parent=1 // pred_check_branch
      %17 = sbr.rel (0) target = $region13
    $region12: #{multi_head_gat.1} parent=1 // pred_region
      _
    $region13: #{multi_head_gat.1} parent=1 // pred_fallthru
      _
    // Predicated region
    $region14: #{multi_head_gat.1} parent=1 // pred_check
      _
    $region15: #{multi_head_gat.1} parent=1 // pred_check_branch
      %19 = sbr.rel (0) target = $region17
    $region16: #{multi_head_gat.1} parent=1 // pred_region
      _
    $region17: #{multi_head_gat.1} parent=1 // pred_fallthru
      _
    // Predicated region
    $region18: #{multi_head_gat.1} parent=1 // pred_check
      _
    $region19: #{multi_head_gat.1} parent=1 // pred_check_branch
      %21 = sbr.rel (0) target = $region21
    $region20: #{multi_head_gat.1} parent=1 // pred_region
      _
    $region21: #{multi_head_gat.1} parent=1 // pred_fallthru
      _
    // Predicated region
    $region22: #{multi_head_gat.1} parent=1 // pred_check
      _
    $region23: #{multi_head_gat.1} parent=1 // pred_check_branch
      %23 = sbr.rel (0) target = $region25
    $region24: #{multi_head_gat.1} parent=1 // pred_region
      _
    $region25: #{multi_head_gat.1} parent=1 // pred_fallthru
      _
    %v24 = vld [vmem:[%s0] sm:$0xff]
    %v25 = vld [vmem:[%s0 + $0x8] sm:$0xff]
    %v26 = vld [vmem:[%s1] sm:$0xff]
    %v27 = vld [vmem:[%s1 + $0x8] sm:$0xff]
    %v28 = vld [vmem:[%s2] sm:$0xff]
    %v29 = vld [vmem:[%s2 + $0x8] sm:$0xff]
    %v30 = vld [vmem:[%s2 + $0x10] sm:$0xff]
    %v31 = vld [vmem:[%s2 + $0x18] sm:$0xff]
    %v32 = vld [vmem:[%s2 + $0x20] sm:$0xff]
    %v33 = vld [vmem:[%s2 + $0x28] sm:$0xff]
    %v34 = vld [vmem:[%s2 + $0x30] sm:$0xff]
    %v35 = vld [vmem:[%s2 + $0x38] sm:$0xff]
    %v36 = vld [vmem:[%s3] sm:$0x3]
    %v38 = vlaneseq
    %v39 = vshrl.u32 %v38, 7
    %v40 = vsub.s32 0, %v39
    %v41 = vrot.slane %v36, %v40
    %v42 = vlaneseq
    %v43 = vshrl.u32 %v42, 7
    %v44 = vsub.s32 1, %v43
    %v45 = vrot.slane %v36, %v44
    %vm48 = vcmask 261120
    %v50 = vsel %vm48, %v24, 0
    %v53 = vsel %vm48, %v25, 0
    %55 = vmatprep.subr.mxu0 0.0
    %56 = vmatpush1.msra.mxu0 0.0
    %57 = vmatprep.subr.mxu0 0.0
    %58 = vmatpush1.msra.mxu0 0.0
    %59 = vmatprep.subr.mxu0 0.0
    %60 = vmatpush1.msra.mxu0 0.0
    %61 = vmatprep.subr.mxu0 0.0
    %62 = vmatpush1.msra.mxu0 0.0
    %63 = vmatprep.subr.mxu0 0.0
    %64 = vmatpush1.msra.mxu0 0.0
    %65 = vmatprep.subr.mxu0 0.0
    %66 = vmatpush1.msra.mxu0 0.0
    %67 = vmatprep.subr.mxu0 0.0
    %68 = vmatpush1.msra.mxu0 0.0
    %69 = vmatprep.subr.mxu0 0.0
    %70 = vmatpush1.msra.mxu0 0.0
    %71 = vmatprep.subr.mxu0 0.0
    %72 = vmatpush1.msra.mxu0 0.0
    %73 = vmatprep.subr.mxu0 0.0
    %74 = vmatpush1.msra.mxu0 0.0
    %75 = vmatprep.subr.mxu0 0.0
    %76 = vmatpush1.msra.mxu0 0.0
    %77 = vmatprep.subr.mxu0 0.0
    %78 = vmatpush1.msra.mxu0 0.0
    %79 = vmatprep.subr.mxu0 %v35
    %80 = vmatpush1.msra.mxu0 %v34
    %81 = vmatprep.subr.mxu0 %v33
    %82 = vmatpush1.msra.mxu0 %v32
    %83 = vmatprep.subr.mxu0 %v31
    %84 = vmatpush1.msra.mxu0 %v30
    %85 = vmatprep.subr.mxu0 %v29
    %86 = vmatpush1.msra.mxu0 %v28
    %87 = vmatprep.subr.mxu0 0.0
    %88 = vmatpush2.msra.mxu0 0.0
    %89 = vmatprep.subr.mxu0 0.0
    %90 = vmatpush2.msra.mxu0 0.0
    %91 = vmatprep.subr.mxu0 0.0
    %92 = vmatpush2.msra.mxu0 0.0
    %93 = vmatprep.subr.mxu0 0.0
    %94 = vmatpush2.msra.mxu0 0.0
    %95 = vmatprep.subr.mxu0 0.0
    %96 = vmatpush2.msra.mxu0 0.0
    %97 = vmatprep.subr.mxu0 0.0
    %98 = vmatpush2.msra.mxu0 0.0
    %99 = vmatprep.subr.mxu0 0.0
    %100 = vmatpush2.msra.mxu0 0.0
    %101 = vmatprep.subr.mxu0 0.0
    %102 = vmatpush2.msra.mxu0 0.0
    %103 = vmatprep.subr.mxu0 0.0
    %104 = vmatpush2.msra.mxu0 0.0
    %105 = vmatprep.subr.mxu0 0.0
    %106 = vmatpush2.msra.mxu0 0.0
    %107 = vmatprep.subr.mxu0 0.0
    %108 = vmatpush2.msra.mxu0 0.0
    %109 = vmatprep.subr.mxu0 0.0
    %110 = vmatpush2.msra.mxu0 0.0
    %111 = vmatprep.subr.mxu0 0.0
    %112 = vmatpush2.msra.mxu0 0.0
    %113 = vmatprep.subr.mxu0 0.0
    %114 = vmatpush2.msra.mxu0 0.0
    %115 = vmatprep.subr.mxu0 0.0
    %116 = vmatpush2.msra.mxu0 0.0
    %117 = vmatprep.subr.mxu0 0.0
    %118 = vmatpush2.msra.mxu0 0.0
    %119 = vmatprep.mubr.f32.mxu0 0.0
    %120 = vmatmul.mubr.f32.gmra.mxu0 %v50
    %v121 = vpop.f32.mrf.mxu0
    %v122 = vadd.f32 %v41, %v121
    %v123 = vpop.f32.mrf.mxu0
    %v124 = vadd.f32 %v45, %v123
    %125 = vmatprep.mubr.f32.mxu0 0.0
    %126 = vmatmul.mubr.f32.gmra.mxu0 %v53
    %v127 = vpop.f32.mrf.mxu0
    %v128 = vadd.f32 %v41, %v127
    %v129 = vpop.f32.mrf.mxu0
    %v130 = vadd.f32 %v45, %v129
    %131 = vdwg.mxu0
    %134 = vrot.lane.b32.xlu0 %v122, 64
    %v135 = vpop.permute.xlu0 %134
    %136 = vrot.lane.b32.xlu0 %v128, 64
    %v137 = vpop.permute.xlu0 %136
    %vm138 = vcmask 130048
    %v139 = vsel %vm138, %v122, 0
    %v141 = vsel %vm138, %v128, 0
    %v143 = vsel %vm138, %v135, 0
    %v145 = vsel %vm138, %v137, 0
    %147 = vmatprep.subr.mxu0 0.0
    %148 = vmatpush1.xpose.msra.mxu0 0.0
    %149 = vmatprep.subr.mxu0 0.0
    %150 = vmatpush1.xpose.msra.mxu0 0.0
    %151 = vmatprep.subr.mxu0 0.0
    %152 = vmatpush1.xpose.msra.mxu0 0.0
    %153 = vmatprep.subr.mxu0 0.0
    %154 = vmatpush1.xpose.msra.mxu0 0.0
    %155 = vmatprep.subr.mxu0 0.0
    %156 = vmatpush1.xpose.msra.mxu0 0.0
    %157 = vmatprep.subr.mxu0 0.0
    %158 = vmatpush1.xpose.msra.mxu0 0.0
    %159 = vmatprep.subr.mxu0 0.0
    %160 = vmatpush1.xpose.msra.mxu0 0.0
    %161 = vmatprep.subr.mxu0 0.0
    %162 = vmatpush1.xpose.msra.mxu0 0.0
    %163 = vmatprep.subr.mxu0 0.0
    %164 = vmatpush1.xpose.msra.mxu0 0.0
    %165 = vmatprep.subr.mxu0 0.0
    %166 = vmatpush1.xpose.msra.mxu0 0.0
    %167 = vmatprep.subr.mxu0 0.0
    %168 = vmatpush1.xpose.msra.mxu0 0.0
    %169 = vmatprep.subr.mxu0 0.0
    %170 = vmatpush1.xpose.msra.mxu0 0.0
    %171 = vmatprep.subr.mxu0 0.0
    %172 = vmatpush1.xpose.msra.mxu0 0.0
    %173 = vmatprep.subr.mxu0 0.0
    %174 = vmatpush1.xpose.msra.mxu0 0.0
    %175 = vmatprep.subr.mxu0 0.0
    %176 = vmatpush1.xpose.msra.mxu0 %v145
    %177 = vmatprep.subr.mxu0 0.0
    %178 = vmatpush1.xpose.msra.mxu0 %v143
    %179 = vmatprep.subr.mxu0 0.0
    %180 = vmatpush2.xpose.msra.mxu0 0.0
    %181 = vmatprep.subr.mxu0 0.0
    %182 = vmatpush2.xpose.msra.mxu0 0.0
    %183 = vmatprep.subr.mxu0 0.0
    %184 = vmatpush2.xpose.msra.mxu0 0.0
    %185 = vmatprep.subr.mxu0 0.0
    %186 = vmatpush2.xpose.msra.mxu0 0.0
    %187 = vmatprep.subr.mxu0 0.0
    %188 = vmatpush2.xpose.msra.mxu0 0.0
    %189 = vmatprep.subr.mxu0 0.0
    %190 = vmatpush2.xpose.msra.mxu0 0.0
    %191 = vmatprep.subr.mxu0 0.0
    %192 = vmatpush2.xpose.msra.mxu0 0.0
    %193 = vmatprep.subr.mxu0 0.0
    %194 = vmatpush2.xpose.msra.mxu0 0.0
    %195 = vmatprep.subr.mxu0 0.0
    %196 = vmatpush2.xpose.msra.mxu0 0.0
    %197 = vmatprep.subr.mxu0 0.0
    %198 = vmatpush2.xpose.msra.mxu0 0.0
    %199 = vmatprep.subr.mxu0 0.0
    %200 = vmatpush2.xpose.msra.mxu0 0.0
    %201 = vmatprep.subr.mxu0 0.0
    %202 = vmatpush2.xpose.msra.mxu0 0.0
    %203 = vmatprep.subr.mxu0 0.0
    %204 = vmatpush2.xpose.msra.mxu0 0.0
    %205 = vmatprep.subr.mxu0 0.0
    %206 = vmatpush2.xpose.msra.mxu0 0.0
    %207 = vmatprep.subr.mxu0 0.0
    %208 = vmatpush2.xpose.msra.mxu0 0.0
    %209 = vmatprep.subr.mxu0 0.0
    %210 = vmatpush2.xpose.msra.mxu0 0.0
    %211 = vmatprep.mubr.f32.mxu0 0.0
    %212 = vmatmul.mubr.f32.gmra.mxu0 %v139
    %v213 = vpop.f32.mrf.mxu0
    %v214 = vadd.f32 %v26, %v213
    %v215 = vpop.f32.mrf.mxu0
    %216 = vmatprep.mubr.f32.mxu0 0.0
    %217 = vmatmul.mubr.f32.gmra.mxu0 %v141
    %v218 = vpop.f32.mrf.mxu0
    %v219 = vadd.f32 %v27, %v218
    %v220 = vpop.f32.mrf.mxu0
    %221 = vdwg.mxu0
    %v222 = vsel %vm138, %v214, -inf
    %223 = vmax.xlane.f32.xlu0 %v222
    %v224 = vpop.xlane.xlu0 %223
    %v225 = vsel %vm138, %v219, -inf
    %226 = vmax.xlane.f32.xlu0 %v225
    %v227 = vpop.xlane.xlu0 %226
    %v228 = vsub.f32 %v214, %v224
    %v229 = vsub.f32 %v219, %v227
    %v230 = vmul.f32 %v228, 1.442695
    %v231 = vpow.pop %v230
    %v232 = vmul.f32 %v229, 1.442695
    %v233 = vpow.pop %v232
    %v234 = vsel %vm138, %v231, 0.0
    %235 = vadd.xlane.f32.xlu0 %v234
    %v236 = vpop.xlane.xlu0 %235
    %v237 = vsel %vm138, %v233, 0.0
    %238 = vadd.xlane.f32.xlu0 %v237
    %v239 = vpop.xlane.xlu0 %238
    %v240 = vmax.f32 %v236, 1e-30
    %v241 = vmax.f32 %v239, 1e-30
    %v243 = vsel %vm138, %v231, 0
    %v246 = vsel %vm138, %v233, 0
    %248 = vmatprep.subr.mxu0 0.0
    %249 = vmatpush1.msra.mxu0 0.0
    %250 = vmatprep.subr.mxu0 0.0
    %251 = vmatpush1.msra.mxu0 0.0
    %252 = vmatprep.subr.mxu0 0.0
    %253 = vmatpush1.msra.mxu0 0.0
    %254 = vmatprep.subr.mxu0 0.0
    %255 = vmatpush1.msra.mxu0 0.0
    %256 = vmatprep.subr.mxu0 0.0
    %257 = vmatpush1.msra.mxu0 0.0
    %258 = vmatprep.subr.mxu0 0.0
    %259 = vmatpush1.msra.mxu0 0.0
    %260 = vmatprep.subr.mxu0 0.0
    %261 = vmatpush1.msra.mxu0 0.0
    %262 = vmatprep.subr.mxu0 0.0
    %263 = vmatpush1.msra.mxu0 0.0
    %264 = vmatprep.subr.mxu0 0.0
    %265 = vmatpush1.msra.mxu0 0.0
    %266 = vmatprep.subr.mxu0 0.0
    %267 = vmatpush1.msra.mxu0 0.0
    %268 = vmatprep.subr.mxu0 0.0
    %269 = vmatpush1.msra.mxu0 0.0
    %270 = vmatprep.subr.mxu0 0.0
    %271 = vmatpush1.msra.mxu0 0.0
    %272 = vmatprep.subr.mxu0 0.0
    %273 = vmatpush1.msra.mxu0 0.0
    %274 = vmatprep.subr.mxu0 0.0
    %275 = vmatpush1.msra.mxu0 0.0
    %276 = vmatprep.subr.mxu0 0.0
    %277 = vmatpush1.msra.mxu0 %v130
    %278 = vmatprep.subr.mxu0 0.0
    %279 = vmatpush1.msra.mxu0 %v124
    %280 = vmatprep.subr.mxu0 0.0
    %281 = vmatpush2.msra.mxu0 0.0
    %282 = vmatprep.subr.mxu0 0.0
    %283 = vmatpush2.msra.mxu0 0.0
    %284 = vmatprep.subr.mxu0 0.0
    %285 = vmatpush2.msra.mxu0 0.0
    %286 = vmatprep.subr.mxu0 0.0
    %287 = vmatpush2.msra.mxu0 0.0
    %288 = vmatprep.subr.mxu0 0.0
    %289 = vmatpush2.msra.mxu0 0.0
    %290 = vmatprep.subr.mxu0 0.0
    %291 = vmatpush2.msra.mxu0 0.0
    %292 = vmatprep.subr.mxu0 0.0
    %293 = vmatpush2.msra.mxu0 0.0
    %294 = vmatprep.subr.mxu0 0.0
    %295 = vmatpush2.msra.mxu0 0.0
    %296 = vmatprep.subr.mxu0 0.0
    %297 = vmatpush2.msra.mxu0 0.0
    %298 = vmatprep.subr.mxu0 0.0
    %299 = vmatpush2.msra.mxu0 0.0
    %300 = vmatprep.subr.mxu0 0.0
    %301 = vmatpush2.msra.mxu0 0.0
    %302 = vmatprep.subr.mxu0 0.0
    %303 = vmatpush2.msra.mxu0 0.0
    %304 = vmatprep.subr.mxu0 0.0
    %305 = vmatpush2.msra.mxu0 0.0
    %306 = vmatprep.subr.mxu0 0.0
    %307 = vmatpush2.msra.mxu0 0.0
    %308 = vmatprep.subr.mxu0 0.0
    %309 = vmatpush2.msra.mxu0 0.0
    %310 = vmatprep.subr.mxu0 0.0
    %311 = vmatpush2.msra.mxu0 0.0
    %312 = vmatprep.mubr.f32.mxu0 0.0
    %313 = vmatmul.mubr.f32.gmra.mxu0 %v243
    %v314 = vpop.f32.mrf.mxu0
    %v315 = vadd.f32 0.0, %v314
    %v316 = vpop.f32.mrf.mxu0
    %317 = vmatprep.mubr.f32.mxu0 0.0
    %318 = vmatmul.mubr.f32.gmra.mxu0 %v246
    %v319 = vpop.f32.mrf.mxu0
    %v320 = vadd.f32 0.0, %v319
    %v321 = vpop.f32.mrf.mxu0
    %322 = vdwg.mxu0
    %v323 = vrcp.pop %v240
    %v324 = vrcp.pop %v241
    %v325 = vmul.f32 %v315, %v323
    %v326 = vmul.f32 %v320, %v324
    %327 = vrot.lane.b32.xlu0 %v122, 112
    %v328 = vpop.permute.xlu0 %327
    %329 = vrot.lane.b32.xlu0 %v128, 112
    %v330 = vpop.permute.xlu0 %329
    %331 = vrot.lane.b32.xlu0 %v122, 48
    %v332 = vpop.permute.xlu0 %331
    %333 = vrot.lane.b32.xlu0 %v128, 48
    %v334 = vpop.permute.xlu0 %333
    %v335 = vsel %vm138, %v328, 0
    %v337 = vsel %vm138, %v330, 0
    %v339 = vsel %vm138, %v332, 0
    %v341 = vsel %vm138, %v334, 0
    %343 = vmatprep.subr.mxu0 0.0
    %344 = vmatpush1.xpose.msra.mxu0 0.0
    %345 = vmatprep.subr.mxu0 0.0
    %346 = vmatpush1.xpose.msra.mxu0 0.0
    %347 = vmatprep.subr.mxu0 0.0
    %348 = vmatpush1.xpose.msra.mxu0 0.0
    %349 = vmatprep.subr.mxu0 0.0
    %350 = vmatpush1.xpose.msra.mxu0 0.0
    %351 = vmatprep.subr.mxu0 0.0
    %352 = vmatpush1.xpose.msra.mxu0 0.0
    %353 = vmatprep.subr.mxu0 0.0
    %354 = vmatpush1.xpose.msra.mxu0 0.0
    %355 = vmatprep.subr.mxu0 0.0
    %356 = vmatpush1.xpose.msra.mxu0 0.0
    %357 = vmatprep.subr.mxu0 0.0
    %358 = vmatpush1.xpose.msra.mxu0 0.0
    %359 = vmatprep.subr.mxu0 0.0
    %360 = vmatpush1.xpose.msra.mxu0 0.0
    %361 = vmatprep.subr.mxu0 0.0
    %362 = vmatpush1.xpose.msra.mxu0 0.0
    %363 = vmatprep.subr.mxu0 0.0
    %364 = vmatpush1.xpose.msra.mxu0 0.0
    %365 = vmatprep.subr.mxu0 0.0
    %366 = vmatpush1.xpose.msra.mxu0 0.0
    %367 = vmatprep.subr.mxu0 0.0
    %368 = vmatpush1.xpose.msra.mxu0 0.0
    %369 = vmatprep.subr.mxu0 0.0
    %370 = vmatpush1.xpose.msra.mxu0 0.0
    %371 = vmatprep.subr.mxu0 0.0
    %372 = vmatpush1.xpose.msra.mxu0 %v341
    %373 = vmatprep.subr.mxu0 0.0
    %374 = vmatpush1.xpose.msra.mxu0 %v339
    %375 = vmatprep.subr.mxu0 0.0
    %376 = vmatpush2.xpose.msra.mxu0 0.0
    %377 = vmatprep.subr.mxu0 0.0
    %378 = vmatpush2.xpose.msra.mxu0 0.0
    %379 = vmatprep.subr.mxu0 0.0
    %380 = vmatpush2.xpose.msra.mxu0 0.0
    %381 = vmatprep.subr.mxu0 0.0
    %382 = vmatpush2.xpose.msra.mxu0 0.0
    %383 = vmatprep.subr.mxu0 0.0
    %384 = vmatpush2.xpose.msra.mxu0 0.0
    %385 = vmatprep.subr.mxu0 0.0
    %386 = vmatpush2.xpose.msra.mxu0 0.0
    %387 = vmatprep.subr.mxu0 0.0
    %388 = vmatpush2.xpose.msra.mxu0 0.0
    %389 = vmatprep.subr.mxu0 0.0
    %390 = vmatpush2.xpose.msra.mxu0 0.0
    %391 = vmatprep.subr.mxu0 0.0
    %392 = vmatpush2.xpose.msra.mxu0 0.0
    %393 = vmatprep.subr.mxu0 0.0
    %394 = vmatpush2.xpose.msra.mxu0 0.0
    %395 = vmatprep.subr.mxu0 0.0
    %396 = vmatpush2.xpose.msra.mxu0 0.0
    %397 = vmatprep.subr.mxu0 0.0
    %398 = vmatpush2.xpose.msra.mxu0 0.0
    %399 = vmatprep.subr.mxu0 0.0
    %400 = vmatpush2.xpose.msra.mxu0 0.0
    %401 = vmatprep.subr.mxu0 0.0
    %402 = vmatpush2.xpose.msra.mxu0 0.0
    %403 = vmatprep.subr.mxu0 0.0
    %404 = vmatpush2.xpose.msra.mxu0 0.0
    %405 = vmatprep.subr.mxu0 0.0
    %406 = vmatpush2.xpose.msra.mxu0 0.0
    %407 = vmatprep.mubr.f32.mxu0 0.0
    %408 = vmatmul.mubr.f32.gmra.mxu0 %v335
    %v409 = vpop.f32.mrf.mxu0
    %v410 = vadd.f32 %v26, %v409
    %v411 = vpop.f32.mrf.mxu0
    %412 = vmatprep.mubr.f32.mxu0 0.0
    %413 = vmatmul.mubr.f32.gmra.mxu0 %v337
    %v414 = vpop.f32.mrf.mxu0
    %v415 = vadd.f32 %v27, %v414
    %v416 = vpop.f32.mrf.mxu0
    %417 = vdwg.mxu0
    %v418 = vsel %vm138, %v410, -inf
    %419 = vmax.xlane.f32.xlu0 %v418
    %v420 = vpop.xlane.xlu0 %419
    %v421 = vsel %vm138, %v415, -inf
    %422 = vmax.xlane.f32.xlu0 %v421
    %v423 = vpop.xlane.xlu0 %422
    %v424 = vsub.f32 %v410, %v420
    %v425 = vsub.f32 %v415, %v423
    %v426 = vmul.f32 %v424, 1.442695
    %v427 = vpow.pop %v426
    %v428 = vmul.f32 %v425, 1.442695
    %v429 = vpow.pop %v428
    %v430 = vsel %vm138, %v427, 0.0
    %431 = vadd.xlane.f32.xlu0 %v430
    %v432 = vpop.xlane.xlu0 %431
    %v433 = vsel %vm138, %v429, 0.0
    %434 = vadd.xlane.f32.xlu0 %v433
    %v435 = vpop.xlane.xlu0 %434
    %v436 = vmax.f32 %v432, 1e-30
    %v437 = vmax.f32 %v435, 1e-30
    %440 = vrot.lane.b32.xlu0 %v124, 112
    %v441 = vpop.permute.xlu0 %440
    %442 = vrot.lane.b32.xlu0 %v130, 112
    %v443 = vpop.permute.xlu0 %442
    %v447 = vsel %vm138, %v427, 0
    %v450 = vsel %vm138, %v429, 0
    %452 = vmatprep.subr.mxu0 0.0
    %453 = vmatpush1.msra.mxu0 0.0
    %454 = vmatprep.subr.mxu0 0.0
    %455 = vmatpush1.msra.mxu0 0.0
    %456 = vmatprep.subr.mxu0 0.0
    %457 = vmatpush1.msra.mxu0 0.0
    %458 = vmatprep.subr.mxu0 0.0
    %459 = vmatpush1.msra.mxu0 0.0
    %460 = vmatprep.subr.mxu0 0.0
    %461 = vmatpush1.msra.mxu0 0.0
    %462 = vmatprep.subr.mxu0 0.0
    %463 = vmatpush1.msra.mxu0 0.0
    %464 = vmatprep.subr.mxu0 0.0
    %465 = vmatpush1.msra.mxu0 0.0
    %466 = vmatprep.subr.mxu0 0.0
    %467 = vmatpush1.msra.mxu0 0.0
    %468 = vmatprep.subr.mxu0 0.0
    %469 = vmatpush1.msra.mxu0 0.0
    %470 = vmatprep.subr.mxu0 0.0
    %471 = vmatpush1.msra.mxu0 0.0
    %472 = vmatprep.subr.mxu0 0.0
    %473 = vmatpush1.msra.mxu0 0.0
    %474 = vmatprep.subr.mxu0 0.0
    %475 = vmatpush1.msra.mxu0 0.0
    %476 = vmatprep.subr.mxu0 0.0
    %477 = vmatpush1.msra.mxu0 0.0
    %478 = vmatprep.subr.mxu0 0.0
    %479 = vmatpush1.msra.mxu0 0.0
    %480 = vmatprep.subr.mxu0 0.0
    %481 = vmatpush1.msra.mxu0 %v443
    %482 = vmatprep.subr.mxu0 0.0
    %483 = vmatpush1.msra.mxu0 %v441
    %484 = vmatprep.subr.mxu0 0.0
    %485 = vmatpush2.msra.mxu0 0.0
    %486 = vmatprep.subr.mxu0 0.0
    %487 = vmatpush2.msra.mxu0 0.0
    %488 = vmatprep.subr.mxu0 0.0
    %489 = vmatpush2.msra.mxu0 0.0
    %490 = vmatprep.subr.mxu0 0.0
    %491 = vmatpush2.msra.mxu0 0.0
    %492 = vmatprep.subr.mxu0 0.0
    %493 = vmatpush2.msra.mxu0 0.0
    %494 = vmatprep.subr.mxu0 0.0
    %495 = vmatpush2.msra.mxu0 0.0
    %496 = vmatprep.subr.mxu0 0.0
    %497 = vmatpush2.msra.mxu0 0.0
    %498 = vmatprep.subr.mxu0 0.0
    %499 = vmatpush2.msra.mxu0 0.0
    %500 = vmatprep.subr.mxu0 0.0
    %501 = vmatpush2.msra.mxu0 0.0
    %502 = vmatprep.subr.mxu0 0.0
    %503 = vmatpush2.msra.mxu0 0.0
    %504 = vmatprep.subr.mxu0 0.0
    %505 = vmatpush2.msra.mxu0 0.0
    %506 = vmatprep.subr.mxu0 0.0
    %507 = vmatpush2.msra.mxu0 0.0
    %508 = vmatprep.subr.mxu0 0.0
    %509 = vmatpush2.msra.mxu0 0.0
    %510 = vmatprep.subr.mxu0 0.0
    %511 = vmatpush2.msra.mxu0 0.0
    %512 = vmatprep.subr.mxu0 0.0
    %513 = vmatpush2.msra.mxu0 0.0
    %514 = vmatprep.subr.mxu0 0.0
    %515 = vmatpush2.msra.mxu0 0.0
    %516 = vmatprep.mubr.f32.mxu0 0.0
    %517 = vmatmul.mubr.f32.gmra.mxu0 %v447
    %v518 = vpop.f32.mrf.mxu0
    %v519 = vadd.f32 0.0, %v518
    %v520 = vpop.f32.mrf.mxu0
    %521 = vmatprep.mubr.f32.mxu0 0.0
    %522 = vmatmul.mubr.f32.gmra.mxu0 %v450
    %v523 = vpop.f32.mrf.mxu0
    %v524 = vadd.f32 0.0, %v523
    %v525 = vpop.f32.mrf.mxu0
    %526 = vdwg.mxu0
    %v527 = vrcp.pop %v436
    %v528 = vrcp.pop %v437
    %v529 = vmul.f32 %v519, %v527
    %v530 = vmul.f32 %v524, %v528
    %531 = vrot.lane.b32.xlu0 %v122, 96
    %v532 = vpop.permute.xlu0 %531
    %533 = vrot.lane.b32.xlu0 %v128, 96
    %v534 = vpop.permute.xlu0 %533
    %535 = vrot.lane.b32.xlu0 %v122, 32
    %v536 = vpop.permute.xlu0 %535
    %537 = vrot.lane.b32.xlu0 %v128, 32
    %v538 = vpop.permute.xlu0 %537
    %v539 = vsel %vm138, %v532, 0
    %v541 = vsel %vm138, %v534, 0
    %v543 = vsel %vm138, %v536, 0
    %v545 = vsel %vm138, %v538, 0
    %547 = vmatprep.subr.mxu0 0.0
    %548 = vmatpush1.xpose.msra.mxu0 0.0
    %549 = vmatprep.subr.mxu0 0.0
    %550 = vmatpush1.xpose.msra.mxu0 0.0
    %551 = vmatprep.subr.mxu0 0.0
    %552 = vmatpush1.xpose.msra.mxu0 0.0
    %553 = vmatprep.subr.mxu0 0.0
    %554 = vmatpush1.xpose.msra.mxu0 0.0
    %555 = vmatprep.subr.mxu0 0.0
    %556 = vmatpush1.xpose.msra.mxu0 0.0
    %557 = vmatprep.subr.mxu0 0.0
    %558 = vmatpush1.xpose.msra.mxu0 0.0
    %559 = vmatprep.subr.mxu0 0.0
    %560 = vmatpush1.xpose.msra.mxu0 0.0
    %561 = vmatprep.subr.mxu0 0.0
    %562 = vmatpush1.xpose.msra.mxu0 0.0
    %563 = vmatprep.subr.mxu0 0.0
    %564 = vmatpush1.xpose.msra.mxu0 0.0
    %565 = vmatprep.subr.mxu0 0.0
    %566 = vmatpush1.xpose.msra.mxu0 0.0
    %567 = vmatprep.subr.mxu0 0.0
    %568 = vmatpush1.xpose.msra.mxu0 0.0
    %569 = vmatprep.subr.mxu0 0.0
    %570 = vmatpush1.xpose.msra.mxu0 0.0
    %571 = vmatprep.subr.mxu0 0.0
    %572 = vmatpush1.xpose.msra.mxu0 0.0
    %573 = vmatprep.subr.mxu0 0.0
    %574 = vmatpush1.xpose.msra.mxu0 0.0
    %575 = vmatprep.subr.mxu0 0.0
    %576 = vmatpush1.xpose.msra.mxu0 %v545
    %577 = vmatprep.subr.mxu0 0.0
    %578 = vmatpush1.xpose.msra.mxu0 %v543
    %579 = vmatprep.subr.mxu0 0.0
    %580 = vmatpush2.xpose.msra.mxu0 0.0
    %581 = vmatprep.subr.mxu0 0.0
    %582 = vmatpush2.xpose.msra.mxu0 0.0
    %583 = vmatprep.subr.mxu0 0.0
    %584 = vmatpush2.xpose.msra.mxu0 0.0
    %585 = vmatprep.subr.mxu0 0.0
    %586 = vmatpush2.xpose.msra.mxu0 0.0
    %587 = vmatprep.subr.mxu0 0.0
    %588 = vmatpush2.xpose.msra.mxu0 0.0
    %589 = vmatprep.subr.mxu0 0.0
    %590 = vmatpush2.xpose.msra.mxu0 0.0
    %591 = vmatprep.subr.mxu0 0.0
    %592 = vmatpush2.xpose.msra.mxu0 0.0
    %593 = vmatprep.subr.mxu0 0.0
    %594 = vmatpush2.xpose.msra.mxu0 0.0
    %595 = vmatprep.subr.mxu0 0.0
    %596 = vmatpush2.xpose.msra.mxu0 0.0
    %597 = vmatprep.subr.mxu0 0.0
    %598 = vmatpush2.xpose.msra.mxu0 0.0
    %599 = vmatprep.subr.mxu0 0.0
    %600 = vmatpush2.xpose.msra.mxu0 0.0
    %601 = vmatprep.subr.mxu0 0.0
    %602 = vmatpush2.xpose.msra.mxu0 0.0
    %603 = vmatprep.subr.mxu0 0.0
    %604 = vmatpush2.xpose.msra.mxu0 0.0
    %605 = vmatprep.subr.mxu0 0.0
    %606 = vmatpush2.xpose.msra.mxu0 0.0
    %607 = vmatprep.subr.mxu0 0.0
    %608 = vmatpush2.xpose.msra.mxu0 0.0
    %609 = vmatprep.subr.mxu0 0.0
    %610 = vmatpush2.xpose.msra.mxu0 0.0
    %611 = vmatprep.mubr.f32.mxu0 0.0
    %612 = vmatmul.mubr.f32.gmra.mxu0 %v539
    %v613 = vpop.f32.mrf.mxu0
    %v614 = vadd.f32 %v26, %v613
    %v615 = vpop.f32.mrf.mxu0
    %616 = vmatprep.mubr.f32.mxu0 0.0
    %617 = vmatmul.mubr.f32.gmra.mxu0 %v541
    %v618 = vpop.f32.mrf.mxu0
    %v619 = vadd.f32 %v27, %v618
    %v620 = vpop.f32.mrf.mxu0
    %621 = vdwg.mxu0
    %v622 = vsel %vm138, %v614, -inf
    %623 = vmax.xlane.f32.xlu0 %v622
    %v624 = vpop.xlane.xlu0 %623
    %v625 = vsel %vm138, %v619, -inf
    %626 = vmax.xlane.f32.xlu0 %v625
    %v627 = vpop.xlane.xlu0 %626
    %v628 = vsub.f32 %v614, %v624
    %v629 = vsub.f32 %v619, %v627
    %v630 = vmul.f32 %v628, 1.442695
    %v631 = vpow.pop %v630
    %v632 = vmul.f32 %v629, 1.442695
    %v633 = vpow.pop %v632
    %v634 = vsel %vm138, %v631, 0.0
    %635 = vadd.xlane.f32.xlu0 %v634
    %v636 = vpop.xlane.xlu0 %635
    %v637 = vsel %vm138, %v633, 0.0
    %638 = vadd.xlane.f32.xlu0 %v637
    %v639 = vpop.xlane.xlu0 %638
    %v640 = vmax.f32 %v636, 1e-30
    %v641 = vmax.f32 %v639, 1e-30
    %642 = vrot.lane.b32.xlu0 %v124, 96
    %v643 = vpop.permute.xlu0 %642
    %644 = vrot.lane.b32.xlu0 %v130, 96
    %v645 = vpop.permute.xlu0 %644
    %v649 = vsel %vm138, %v631, 0
    %v652 = vsel %vm138, %v633, 0
    %654 = vmatprep.subr.mxu0 0.0
    %655 = vmatpush1.msra.mxu0 0.0
    %656 = vmatprep.subr.mxu0 0.0
    %657 = vmatpush1.msra.mxu0 0.0
    %658 = vmatprep.subr.mxu0 0.0
    %659 = vmatpush1.msra.mxu0 0.0
    %660 = vmatprep.subr.mxu0 0.0
    %661 = vmatpush1.msra.mxu0 0.0
    %662 = vmatprep.subr.mxu0 0.0
    %663 = vmatpush1.msra.mxu0 0.0
    %664 = vmatprep.subr.mxu0 0.0
    %665 = vmatpush1.msra.mxu0 0.0
    %666 = vmatprep.subr.mxu0 0.0
    %667 = vmatpush1.msra.mxu0 0.0
    %668 = vmatprep.subr.mxu0 0.0
    %669 = vmatpush1.msra.mxu0 0.0
    %670 = vmatprep.subr.mxu0 0.0
    %671 = vmatpush1.msra.mxu0 0.0
    %672 = vmatprep.subr.mxu0 0.0
    %673 = vmatpush1.msra.mxu0 0.0
    %674 = vmatprep.subr.mxu0 0.0
    %675 = vmatpush1.msra.mxu0 0.0
    %676 = vmatprep.subr.mxu0 0.0
    %677 = vmatpush1.msra.mxu0 0.0
    %678 = vmatprep.subr.mxu0 0.0
    %679 = vmatpush1.msra.mxu0 0.0
    %680 = vmatprep.subr.mxu0 0.0
    %681 = vmatpush1.msra.mxu0 0.0
    %682 = vmatprep.subr.mxu0 0.0
    %683 = vmatpush1.msra.mxu0 %v645
    %684 = vmatprep.subr.mxu0 0.0
    %685 = vmatpush1.msra.mxu0 %v643
    %686 = vmatprep.subr.mxu0 0.0
    %687 = vmatpush2.msra.mxu0 0.0
    %688 = vmatprep.subr.mxu0 0.0
    %689 = vmatpush2.msra.mxu0 0.0
    %690 = vmatprep.subr.mxu0 0.0
    %691 = vmatpush2.msra.mxu0 0.0
    %692 = vmatprep.subr.mxu0 0.0
    %693 = vmatpush2.msra.mxu0 0.0
    %694 = vmatprep.subr.mxu0 0.0
    %695 = vmatpush2.msra.mxu0 0.0
    %696 = vmatprep.subr.mxu0 0.0
    %697 = vmatpush2.msra.mxu0 0.0
    %698 = vmatprep.subr.mxu0 0.0
    %699 = vmatpush2.msra.mxu0 0.0
    %700 = vmatprep.subr.mxu0 0.0
    %701 = vmatpush2.msra.mxu0 0.0
    %702 = vmatprep.subr.mxu0 0.0
    %703 = vmatpush2.msra.mxu0 0.0
    %704 = vmatprep.subr.mxu0 0.0
    %705 = vmatpush2.msra.mxu0 0.0
    %706 = vmatprep.subr.mxu0 0.0
    %707 = vmatpush2.msra.mxu0 0.0
    %708 = vmatprep.subr.mxu0 0.0
    %709 = vmatpush2.msra.mxu0 0.0
    %710 = vmatprep.subr.mxu0 0.0
    %711 = vmatpush2.msra.mxu0 0.0
    %712 = vmatprep.subr.mxu0 0.0
    %713 = vmatpush2.msra.mxu0 0.0
    %714 = vmatprep.subr.mxu0 0.0
    %715 = vmatpush2.msra.mxu0 0.0
    %716 = vmatprep.subr.mxu0 0.0
    %717 = vmatpush2.msra.mxu0 0.0
    %718 = vmatprep.mubr.f32.mxu0 0.0
    %719 = vmatmul.mubr.f32.gmra.mxu0 %v649
    %v720 = vpop.f32.mrf.mxu0
    %v721 = vadd.f32 0.0, %v720
    %v722 = vpop.f32.mrf.mxu0
    %723 = vmatprep.mubr.f32.mxu0 0.0
    %724 = vmatmul.mubr.f32.gmra.mxu0 %v652
    %v725 = vpop.f32.mrf.mxu0
    %v726 = vadd.f32 0.0, %v725
    %v727 = vpop.f32.mrf.mxu0
    %728 = vdwg.mxu0
    %v729 = vrcp.pop %v640
    %v730 = vrcp.pop %v641
    %v731 = vmul.f32 %v721, %v729
    %v732 = vmul.f32 %v726, %v730
    %733 = vrot.lane.b32.xlu0 %v122, 80
    %v734 = vpop.permute.xlu0 %733
    %735 = vrot.lane.b32.xlu0 %v128, 80
    %v736 = vpop.permute.xlu0 %735
    %737 = vrot.lane.b32.xlu0 %v122, 16
    %v738 = vpop.permute.xlu0 %737
    %739 = vrot.lane.b32.xlu0 %v128, 16
    %v740 = vpop.permute.xlu0 %739
    %v741 = vsel %vm138, %v734, 0
    %v743 = vsel %vm138, %v736, 0
    %v745 = vsel %vm138, %v738, 0
    %v747 = vsel %vm138, %v740, 0
    %749 = vmatprep.subr.mxu0 0.0
    %750 = vmatpush1.xpose.msra.mxu0 0.0
    %751 = vmatprep.subr.mxu0 0.0
    %752 = vmatpush1.xpose.msra.mxu0 0.0
    %753 = vmatprep.subr.mxu0 0.0
    %754 = vmatpush1.xpose.msra.mxu0 0.0
    %755 = vmatprep.subr.mxu0 0.0
    %756 = vmatpush1.xpose.msra.mxu0 0.0
    %757 = vmatprep.subr.mxu0 0.0
    %758 = vmatpush1.xpose.msra.mxu0 0.0
    %759 = vmatprep.subr.mxu0 0.0
    %760 = vmatpush1.xpose.msra.mxu0 0.0
    %761 = vmatprep.subr.mxu0 0.0
    %762 = vmatpush1.xpose.msra.mxu0 0.0
    %763 = vmatprep.subr.mxu0 0.0
    %764 = vmatpush1.xpose.msra.mxu0 0.0
    %765 = vmatprep.subr.mxu0 0.0
    %766 = vmatpush1.xpose.msra.mxu0 0.0
    %767 = vmatprep.subr.mxu0 0.0
    %768 = vmatpush1.xpose.msra.mxu0 0.0
    %769 = vmatprep.subr.mxu0 0.0
    %770 = vmatpush1.xpose.msra.mxu0 0.0
    %771 = vmatprep.subr.mxu0 0.0
    %772 = vmatpush1.xpose.msra.mxu0 0.0
    %773 = vmatprep.subr.mxu0 0.0
    %774 = vmatpush1.xpose.msra.mxu0 0.0
    %775 = vmatprep.subr.mxu0 0.0
    %776 = vmatpush1.xpose.msra.mxu0 0.0
    %777 = vmatprep.subr.mxu0 0.0
    %778 = vmatpush1.xpose.msra.mxu0 %v747
    %779 = vmatprep.subr.mxu0 0.0
    %780 = vmatpush1.xpose.msra.mxu0 %v745
    %781 = vmatprep.subr.mxu0 0.0
    %782 = vmatpush2.xpose.msra.mxu0 0.0
    %783 = vmatprep.subr.mxu0 0.0
    %784 = vmatpush2.xpose.msra.mxu0 0.0
    %785 = vmatprep.subr.mxu0 0.0
    %786 = vmatpush2.xpose.msra.mxu0 0.0
    %787 = vmatprep.subr.mxu0 0.0
    %788 = vmatpush2.xpose.msra.mxu0 0.0
    %789 = vmatprep.subr.mxu0 0.0
    %790 = vmatpush2.xpose.msra.mxu0 0.0
    %791 = vmatprep.subr.mxu0 0.0
    %792 = vmatpush2.xpose.msra.mxu0 0.0
    %793 = vmatprep.subr.mxu0 0.0
    %794 = vmatpush2.xpose.msra.mxu0 0.0
    %795 = vmatprep.subr.mxu0 0.0
    %796 = vmatpush2.xpose.msra.mxu0 0.0
    %797 = vmatprep.subr.mxu0 0.0
    %798 = vmatpush2.xpose.msra.mxu0 0.0
    %799 = vmatprep.subr.mxu0 0.0
    %800 = vmatpush2.xpose.msra.mxu0 0.0
    %801 = vmatprep.subr.mxu0 0.0
    %802 = vmatpush2.xpose.msra.mxu0 0.0
    %803 = vmatprep.subr.mxu0 0.0
    %804 = vmatpush2.xpose.msra.mxu0 0.0
    %805 = vmatprep.subr.mxu0 0.0
    %806 = vmatpush2.xpose.msra.mxu0 0.0
    %807 = vmatprep.subr.mxu0 0.0
    %808 = vmatpush2.xpose.msra.mxu0 0.0
    %809 = vmatprep.subr.mxu0 0.0
    %810 = vmatpush2.xpose.msra.mxu0 0.0
    %811 = vmatprep.subr.mxu0 0.0
    %812 = vmatpush2.xpose.msra.mxu0 0.0
    %813 = vmatprep.mubr.f32.mxu0 0.0
    %814 = vmatmul.mubr.f32.gmra.mxu0 %v741
    %v815 = vpop.f32.mrf.mxu0
    %v816 = vadd.f32 %v26, %v815
    %v817 = vpop.f32.mrf.mxu0
    %818 = vmatprep.mubr.f32.mxu0 0.0
    %819 = vmatmul.mubr.f32.gmra.mxu0 %v743
    %v820 = vpop.f32.mrf.mxu0
    %v821 = vadd.f32 %v27, %v820
    %v822 = vpop.f32.mrf.mxu0
    %823 = vdwg.mxu0
    %v824 = vsel %vm138, %v816, -inf
    %825 = vmax.xlane.f32.xlu0 %v824
    %v826 = vpop.xlane.xlu0 %825
    %v827 = vsel %vm138, %v821, -inf
    %828 = vmax.xlane.f32.xlu0 %v827
    %v829 = vpop.xlane.xlu0 %828
    %v830 = vsub.f32 %v816, %v826
    %v831 = vsub.f32 %v821, %v829
    %v832 = vmul.f32 %v830, 1.442695
    %v833 = vpow.pop %v832
    %v834 = vmul.f32 %v831, 1.442695
    %v835 = vpow.pop %v834
    %v836 = vsel %vm138, %v833, 0.0
    %837 = vadd.xlane.f32.xlu0 %v836
    %v838 = vpop.xlane.xlu0 %837
    %v839 = vsel %vm138, %v835, 0.0
    %840 = vadd.xlane.f32.xlu0 %v839
    %v841 = vpop.xlane.xlu0 %840
    %v842 = vmax.f32 %v838, 1e-30
    %v843 = vmax.f32 %v841, 1e-30
    %844 = vrot.lane.b32.xlu0 %v124, 80
    %v845 = vpop.permute.xlu0 %844
    %846 = vrot.lane.b32.xlu0 %v130, 80
    %v847 = vpop.permute.xlu0 %846
    %v851 = vsel %vm138, %v833, 0
    %v854 = vsel %vm138, %v835, 0
    %856 = vmatprep.subr.mxu0 0.0
    %857 = vmatpush1.msra.mxu0 0.0
    %858 = vmatprep.subr.mxu0 0.0
    %859 = vmatpush1.msra.mxu0 0.0
    %860 = vmatprep.subr.mxu0 0.0
    %861 = vmatpush1.msra.mxu0 0.0
    %862 = vmatprep.subr.mxu0 0.0
    %863 = vmatpush1.msra.mxu0 0.0
    %864 = vmatprep.subr.mxu0 0.0
    %865 = vmatpush1.msra.mxu0 0.0
    %866 = vmatprep.subr.mxu0 0.0
    %867 = vmatpush1.msra.mxu0 0.0
    %868 = vmatprep.subr.mxu0 0.0
    %869 = vmatpush1.msra.mxu0 0.0
    %870 = vmatprep.subr.mxu0 0.0
    %871 = vmatpush1.msra.mxu0 0.0
    %872 = vmatprep.subr.mxu0 0.0
    %873 = vmatpush1.msra.mxu0 0.0
    %874 = vmatprep.subr.mxu0 0.0
    %875 = vmatpush1.msra.mxu0 0.0
    %876 = vmatprep.subr.mxu0 0.0
    %877 = vmatpush1.msra.mxu0 0.0
    %878 = vmatprep.subr.mxu0 0.0
    %879 = vmatpush1.msra.mxu0 0.0
    %880 = vmatprep.subr.mxu0 0.0
    %881 = vmatpush1.msra.mxu0 0.0
    %882 = vmatprep.subr.mxu0 0.0
    %883 = vmatpush1.msra.mxu0 0.0
    %884 = vmatprep.subr.mxu0 0.0
    %885 = vmatpush1.msra.mxu0 %v847
    %886 = vmatprep.subr.mxu0 0.0
    %887 = vmatpush1.msra.mxu0 %v845
    %888 = vmatprep.subr.mxu0 0.0
    %889 = vmatpush2.msra.mxu0 0.0
    %890 = vmatprep.subr.mxu0 0.0
    %891 = vmatpush2.msra.mxu0 0.0
    %892 = vmatprep.subr.mxu0 0.0
    %893 = vmatpush2.msra.mxu0 0.0
    %894 = vmatprep.subr.mxu0 0.0
    %895 = vmatpush2.msra.mxu0 0.0
    %896 = vmatprep.subr.mxu0 0.0
    %897 = vmatpush2.msra.mxu0 0.0
    %898 = vmatprep.subr.mxu0 0.0
    %899 = vmatpush2.msra.mxu0 0.0
    %900 = vmatprep.subr.mxu0 0.0
    %901 = vmatpush2.msra.mxu0 0.0
    %902 = vmatprep.subr.mxu0 0.0
    %903 = vmatpush2.msra.mxu0 0.0
    %904 = vmatprep.subr.mxu0 0.0
    %905 = vmatpush2.msra.mxu0 0.0
    %906 = vmatprep.subr.mxu0 0.0
    %907 = vmatpush2.msra.mxu0 0.0
    %908 = vmatprep.subr.mxu0 0.0
    %909 = vmatpush2.msra.mxu0 0.0
    %910 = vmatprep.subr.mxu0 0.0
    %911 = vmatpush2.msra.mxu0 0.0
    %912 = vmatprep.subr.mxu0 0.0
    %913 = vmatpush2.msra.mxu0 0.0
    %914 = vmatprep.subr.mxu0 0.0
    %915 = vmatpush2.msra.mxu0 0.0
    %916 = vmatprep.subr.mxu0 0.0
    %917 = vmatpush2.msra.mxu0 0.0
    %918 = vmatprep.subr.mxu0 0.0
    %919 = vmatpush2.msra.mxu0 0.0
    %920 = vmatprep.mubr.f32.mxu0 0.0
    %921 = vmatmul.mubr.f32.gmra.mxu0 %v851
    %v922 = vpop.f32.mrf.mxu0
    %v923 = vadd.f32 0.0, %v922
    %v924 = vpop.f32.mrf.mxu0
    %925 = vmatprep.mubr.f32.mxu0 0.0
    %926 = vmatmul.mubr.f32.gmra.mxu0 %v854
    %v927 = vpop.f32.mrf.mxu0
    %v928 = vadd.f32 0.0, %v927
    %v929 = vpop.f32.mrf.mxu0
    %930 = vdwg.mxu0
    %v931 = vrcp.pop %v842
    %v932 = vrcp.pop %v843
    %v933 = vmul.f32 %v923, %v931
    %v934 = vmul.f32 %v928, %v932
    %937 = vrot.lane.b32.xlu0 %v529, 16
    %v938 = vpop.permute.xlu0 %937
    %939 = vrot.lane.b32.xlu0 %v530, 16
    %v940 = vpop.permute.xlu0 %939
    %945 = vrot.lane.b32.xlu0 %v731, 32
    %v946 = vpop.permute.xlu0 %945
    %947 = vrot.lane.b32.xlu0 %v732, 32
    %v948 = vpop.permute.xlu0 %947
    %953 = vrot.lane.b32.xlu0 %v933, 48
    %v954 = vpop.permute.xlu0 %953
    %955 = vrot.lane.b32.xlu0 %v934, 48
    %v956 = vpop.permute.xlu0 %955
    %v959 = vsel %vm138, %v325, %v938
    %v960 = vsel %vm138, %v326, %v940
    %v961 = vsel %vm48, %v959, %v946
    %v962 = vsel %vm48, %v960, %v948
    %vm963 = vcmask 392192
    %v964 = vsel %vm963, %v961, %v954
    %v965 = vsel %vm963, %v962, %v956
    %v966 = vld [vmem:[%s4] sm:$0xff]
    %v967 = vld [vmem:[%s4 + $0x8] sm:$0xff]
    %v968 = vld [vmem:[%s4 + $0x10] sm:$0xff]
    %v969 = vld [vmem:[%s4 + $0x18] sm:$0xff]
    %v970 = vld [vmem:[%s4 + $0x20] sm:$0xff]
    %v971 = vld [vmem:[%s4 + $0x28] sm:$0xff]
    %v972 = vld [vmem:[%s4 + $0x30] sm:$0xff]
    %v973 = vld [vmem:[%s4 + $0x38] sm:$0xff]
    %v974 = vld [vmem:[%s5] sm:$0x1]
    %v976 = vlaneseq
    %v977 = vshrl.u32 %v976, 7
    %v978 = vsub.s32 0, %v977
    %v979 = vrot.slane %v974, %v978
    %vm981 = vcmask 523264
    %v983 = vsel %vm981, %v964, 0
    %v986 = vsel %vm981, %v965, 0
    %988 = vmatprep.subr.mxu0 0.0
    %989 = vmatpush1.msra.mxu0 0.0
    %990 = vmatprep.subr.mxu0 0.0
    %991 = vmatpush1.msra.mxu0 0.0
    %992 = vmatprep.subr.mxu0 0.0
    %993 = vmatpush1.msra.mxu0 0.0
    %994 = vmatprep.subr.mxu0 0.0
    %995 = vmatpush1.msra.mxu0 0.0
    %996 = vmatprep.subr.mxu0 0.0
    %997 = vmatpush1.msra.mxu0 0.0
    %998 = vmatprep.subr.mxu0 0.0
    %999 = vmatpush1.msra.mxu0 0.0
    %1000 = vmatprep.subr.mxu0 0.0
    %1001 = vmatpush1.msra.mxu0 0.0
    %1002 = vmatprep.subr.mxu0 0.0
    %1003 = vmatpush1.msra.mxu0 0.0
    %1004 = vmatprep.subr.mxu0 0.0
    %1005 = vmatpush1.msra.mxu0 %v973
    %1006 = vmatprep.subr.mxu0 0.0
    %1007 = vmatpush1.msra.mxu0 %v972
    %1008 = vmatprep.subr.mxu0 0.0
    %1009 = vmatpush1.msra.mxu0 %v971
    %1010 = vmatprep.subr.mxu0 0.0
    %1011 = vmatpush1.msra.mxu0 %v970
    %1012 = vmatprep.subr.mxu0 0.0
    %1013 = vmatpush1.msra.mxu0 %v969
    %1014 = vmatprep.subr.mxu0 0.0
    %1015 = vmatpush1.msra.mxu0 %v968
    %1016 = vmatprep.subr.mxu0 0.0
    %1017 = vmatpush1.msra.mxu0 %v967
    %1018 = vmatprep.subr.mxu0 0.0
    %1019 = vmatpush1.msra.mxu0 %v966
    %1020 = vmatprep.subr.mxu0 0.0
    %1021 = vmatpush2.msra.mxu0 0.0
    %1022 = vmatprep.subr.mxu0 0.0
    %1023 = vmatpush2.msra.mxu0 0.0
    %1024 = vmatprep.subr.mxu0 0.0
    %1025 = vmatpush2.msra.mxu0 0.0
    %1026 = vmatprep.subr.mxu0 0.0
    %1027 = vmatpush2.msra.mxu0 0.0
    %1028 = vmatprep.subr.mxu0 0.0
    %1029 = vmatpush2.msra.mxu0 0.0
    %1030 = vmatprep.subr.mxu0 0.0
    %1031 = vmatpush2.msra.mxu0 0.0
    %1032 = vmatprep.subr.mxu0 0.0
    %1033 = vmatpush2.msra.mxu0 0.0
    %1034 = vmatprep.subr.mxu0 0.0
    %1035 = vmatpush2.msra.mxu0 0.0
    %1036 = vmatprep.subr.mxu0 0.0
    %1037 = vmatpush2.msra.mxu0 0.0
    %1038 = vmatprep.subr.mxu0 0.0
    %1039 = vmatpush2.msra.mxu0 0.0
    %1040 = vmatprep.subr.mxu0 0.0
    %1041 = vmatpush2.msra.mxu0 0.0
    %1042 = vmatprep.subr.mxu0 0.0
    %1043 = vmatpush2.msra.mxu0 0.0
    %1044 = vmatprep.subr.mxu0 0.0
    %1045 = vmatpush2.msra.mxu0 0.0
    %1046 = vmatprep.subr.mxu0 0.0
    %1047 = vmatpush2.msra.mxu0 0.0
    %1048 = vmatprep.subr.mxu0 0.0
    %1049 = vmatpush2.msra.mxu0 0.0
    %1050 = vmatprep.subr.mxu0 0.0
    %1051 = vmatpush2.msra.mxu0 0.0
    %1052 = vmatprep.mubr.f32.mxu0 0.0
    %1053 = vmatmul.mubr.f32.gmra.mxu0 %v983
    %v1054 = vpop.f32.mrf.mxu0
    %v1055 = vadd.f32 %v979, %v1054
    %v1056 = vpop.f32.mrf.mxu0
    %1057 = vmatprep.mubr.f32.mxu0 0.0
    %1058 = vmatmul.mubr.f32.gmra.mxu0 %v986
    %v1059 = vpop.f32.mrf.mxu0
    %v1060 = vadd.f32 %v979, %v1059
    %v1061 = vpop.f32.mrf.mxu0
    %1062 = vdwg.mxu0
    %v1063 = vmax.f32 %v1055, 0.0
    %v1064 = vmax.f32 %v1060, 0.0
    %1065 = vst.msk [vmem:[#allocation2] sm:$0xff] %vm981, %v1063
    %1066 = vst.msk [vmem:[#allocation2 + $0x8] sm:$0xff] %vm981, %v1064
    // Predicated region
    $region26: #{multi_head_gat.1} parent=1 // pred_check
      _
    $region27: #{multi_head_gat.1} parent=1 // pred_check_branch
      %1068 = sbr.rel (0) target = $region29
    $region28: #{multi_head_gat.1} parent=1 // pred_region
      %s1070 = ssub.s32 256, 256
      %1071 = vsyncadd [#allocation3], %s1070
      %s1072 = sshll.u32 [#allocation2], 4
      %s1073 = int_to_ptr.vmem [resolvable:$true] %s1072
      %1078 = dma.vmem_to_hbm [thread:$0]  %s1073, 256, %s6, [#allocation3], 128, 128, 8
    $region29: #{multi_head_gat.1} parent=1 // pred_fallthru
      _
    // Predicated region
    $region30: #{multi_head_gat.1} parent=1 // pred_check
      _
    $region31: #{multi_head_gat.1} parent=1 // pred_check_branch
      %1080 = sbr.rel (0) target = $region33
    $region32: #{multi_head_gat.1} parent=1 // pred_region
      %1081 = dma.done [#allocation3], 256
    $region33: #{multi_head_gat.1} parent=1 // pred_fallthru
      _
    %1082 = vsyncpa [#allocation3], 1

</llo_original>
